<compile_context>
chip_gen: v7x
topology: tpu7x:2x2x1
jax: 0.10.0
libtpu: 0.0.40
codegen_flags: <defaults>
</compile_context>

<pallas_src>
import functools

import jax
import jax.numpy as jnp
from jax.experimental import pallas as pl
from jax.experimental.pallas import tpu as pltpu


# ---------------------------------------------------------------------------
# small helpers
# ---------------------------------------------------------------------------
def _round_up(x, m):
    return (x + m - 1) // m * m


def _pad_to(a, shape):
    pads = [(0, t - s) for s, t in zip(a.shape, shape)]
    if all(p == (0, 0) for p in pads):
        return a
    return jnp.pad(a, pads)


def _apply_activation(x, activation):
    if activation == "relu":
        return jnp.maximum(x, 0.0)
    elif activation == "tanh":
        return jnp.tanh(x)
    elif activation == "leaky_relu":
        return jnp.where(x >= 0.0, x, 0.01 * x)
    elif activation == "sigmoid":
        return jax.nn.sigmoid(x)
    elif activation is None:
        return x
    else:
        raise NotImplementedError(f"Activation {activation} not supported")


def _vmem_capacity_bytes():
    """Physical VMEM per TensorCore (128 MiB v5e/v6e, 64 MiB v7x)."""
    try:
        info = pltpu.get_tpu_info()
        for name in ("vmem_capacity_bytes", "vmem_size_bytes", "vmem_bytes"):
            v = getattr(info, name, None)
            if v:
                return int(v)
    except Exception:
        pass
    return 64 * 1024 * 1024  # conservative (v7x per-TC)


def _largest_divisor_tile(dim, candidates=(512, 256, 128)):
    for c in candidates:
        if dim % c == 0:
            return c
    return 128


# ---------------------------------------------------------------------------
# One-time parameter preparation: pad to (8,128)-friendly shapes, split skip
# weights into (main, res) blocks, cast weights to the compute dtype.
# ---------------------------------------------------------------------------
def prepare_fc_params(params, skip_layers, compute_dtype=jnp.bfloat16):
    first_in = params[0][0].shape[0]
    first_skip = skip_layers is not None and (1 % (skip_layers + 1) == 0)
    d0 = first_in // 2 if first_skip else first_in

    cur_dim, res_dim = d0, d0
    plan = []
    for i, (w_t, b) in enumerate(params):
        in_dim, out_dim = w_t.shape
        out_pad = _round_up(out_dim, 128)
        has_skip = skip_layers is not None and (i + 1) % (skip_layers + 1) == 0
        if has_skip:
            assert in_dim == cur_dim + res_dim
            w_main = _pad_to(w_t[:cur_dim],
                             (_round_up(cur_dim, 128), out_pad)).astype(compute_dtype)
            w_res = _pad_to(w_t[cur_dim:],
                            (_round_up(res_dim, 128), out_pad)).astype(compute_dtype)
        else:
            assert in_dim == cur_dim
            w_main = _pad_to(w_t,
                             (_round_up(in_dim, 128), out_pad)).astype(compute_dtype)
            w_res = None
        b_pad = _pad_to(jnp.asarray(b, jnp.float32).reshape(1, -1), (1, out_pad))
        plan.append(dict(has_skip=has_skip, w_main=w_main, w_res=w_res,
                         b=b_pad, out_dim=out_dim))
        if has_skip:
            res_dim = out_dim
        cur_dim = out_dim
    return plan


# ---------------------------------------------------------------------------
# Fused whole-MLP kernel (small / medium configs): one launch, activations
# never leave VMEM, batch grid keeps weights resident + enables megacore.
# ---------------------------------------------------------------------------
def _fused_mlp_kernel(*refs, layer_has_skip, activation, compute_dtype):
    # refs = [x_ref, (w_main, [w_res], b) per layer ..., o_ref]
    x_ref, o_ref = refs[0], refs[-1]
    p_refs = refs[1:-1]
    n_layers = len(layer_has_skip)

    x = x_ref[...].astype(jnp.float32)
    x_res = x
    idx = 0
    for i, has_skip in enumerate(layer_has_skip):
        w = p_refs[idx][...]
        idx += 1
        acc = jnp.dot(x.astype(compute_dtype), w,
                      preferred_element_type=jnp.float32)
        if has_skip:
            # fused skip-concat: cat([x, x_res]) @ W == x @ W_top + x_res @ W_bot
            w_res = p_refs[idx][...]
            idx += 1
            acc = acc + jnp.dot(x_res.astype(compute_dtype), w_res,
                                preferred_element_type=jnp.float32)
        b = p_refs[idx][...]
        idx += 1
        acc = acc + b.astype(jnp.float32)
        if has_skip:
            x_res = acc  # pre-activation clone (matches the PyTorch module)
        if i < n_layers - 1:
            acc = _apply_activation(acc, activation)
        x = acc
    o_ref[...] = x.astype(o_ref.dtype)


def fc_module_forward_fused(plan, x, activation="relu", *, tm_b=128,
                            vmem_limit_bytes=None):
    """Whole MLP in one pallas_call; grid over batch tiles only."""
    if vmem_limit_bytes is None:
        vmem_limit_bytes = min(_vmem_capacity_bytes() * 3 // 4, 64 * 1024 * 1024)

    B, d0 = x.shape
    compute_dtype = plan[0]["w_main"].dtype
    d0_pad = _round_up(d0, 128)
    tm_b = min(tm_b, _round_up(max(B, 1), 8))
    B_pad = _round_up(B, tm_b)
    x_pad = _pad_to(x, (B_pad, d0_pad))

    kernel_inputs = []
    layer_has_skip = []
    flops = 0
    transcend = 0
    for i, lp in enumerate(plan):
        kernel_inputs.append(lp["w_main"])
        flops += 2 * B_pad * lp["w_main"].shape[0] * lp["w_main"].shape[1]
        if lp["has_skip"]:
            kernel_inputs.append(lp["w_res"])
            flops += 2 * B_pad * lp["w_res"].shape[0] * lp["w_res"].shape[1]
        kernel_inputs.append(lp["b"])
        layer_has_skip.append(lp["has_skip"])
        if i < len(plan) - 1 and activation in ("tanh", "sigmoid"):
            transcend += B_pad * lp["w_main"].shape[1]

    out_pad = plan[-1]["w_main"].shape[1]
    out_dim = plan[-1]["out_dim"]

    bytes_accessed = (x_pad.size * x_pad.dtype.itemsize
                      + B_pad * out_pad * x.dtype.itemsize)
    for a in kernel_inputs:
        bytes_accessed += a.size * a.dtype.itemsize

    kernel = functools.partial(
        _fused_mlp_kernel,
        layer_has_skip=tuple(layer_has_skip),
        activation=activation,
        compute_dtype=compute_dtype,
    )

    in_specs = [pl.BlockSpec((tm_b, d0_pad), lambda i: (i, 0))]
    in_specs += [pl.BlockSpec(a.shape, lambda i: (0, 0)) for a in kernel_inputs]

    out = pl.pallas_call(
        kernel,
        out_shape=jax.ShapeDtypeStruct((B_pad, out_pad), x.dtype),
        grid_spec=pltpu.PrefetchScalarGridSpec(
            num_scalar_prefetch=0,
            grid=(B_pad // tm_b,),
            in_specs=in_specs,
            out_specs=pl.BlockSpec((tm_b, out_pad), lambda i: (i, 0)),
        ),
        compiler_params=pltpu.CompilerParams(
            dimension_semantics=("parallel",),
            vmem_limit_bytes=vmem_limit_bytes),
        cost_estimate=pl.CostEstimate(flops=flops, transcendentals=transcend,
                                      bytes_accessed=bytes_accessed),
    )(x_pad, *kernel_inputs)
    return out[:B, :out_dim]


# ---------------------------------------------------------------------------
# Tiled per-layer kernels (large configs).
#  - single-K kernel: full reduction in one step (no scratch / pl.when),
#    optional fused residual input (skip concat) and optional pre-activation
#    second output.
#  - multi-K kernel: (M, N, K) grid with f32 VMEM accumulator for very large K.
# ---------------------------------------------------------------------------
def _linear_single_k_kernel(*refs, has_res, dual_out, activation, compute_dtype):
    idx = 0
    x_ref = refs[idx]; idx += 1
    xres_ref = None
    if has_res:
        xres_ref = refs[idx]; idx += 1
    w_ref = refs[idx]; idx += 1
    wres_ref = None
    if has_res:
        wres_ref = refs[idx]; idx += 1
    b_ref = refs[idx]; idx += 1
    y_ref = refs[idx]; idx += 1
    yres_ref = refs[idx] if dual_out else None

    acc = jnp.dot(x_ref[...].astype(compute_dtype), w_ref[...],
                  preferred_element_type=jnp.float32)
    if has_res:
        acc = acc + jnp.dot(xres_ref[...].astype(compute_dtype), wres_ref[...],
                            preferred_element_type=jnp.float32)
    acc = acc + b_ref[...].astype(jnp.float32)
    if dual_out:
        yres_ref[...] = acc.astype(yres_ref.dtype)  # pre-activation (x_res)
    y_ref[...] = _apply_activation(acc, activation).astype(y_ref.dtype)


def _linear_multi_k_kernel(*refs, dual_out, activation, compute_dtype):
    x_ref, w_ref, b_ref = refs[0], refs[1], refs[2]
    y_ref = refs[3]
    if dual_out:
        yres_ref, acc_ref = refs[4], refs[5]
    else:
        yres_ref, acc_ref = None, refs[4]

    k = pl.program_id(2)

    @pl.when(k == 0)
    def _init():
        acc_ref[...] = jnp.zeros_like(acc_ref)

    acc_ref[...] += jnp.dot(x_ref[...].astype(compute_dtype), w_ref[...],
                            preferred_element_type=jnp.float32)

    @pl.when(k == pl.num_programs(2) - 1)
    def _finalize():
        acc = acc_ref[...] + b_ref[...].astype(jnp.float32)
        if dual_out:
            yres_ref[...] = acc.astype(yres_ref.dtype)
        y_ref[...] = _apply_activation(acc, activation).astype(y_ref.dtype)


def _tiled_layer(x_p, xres_p, lp, activation, want_pre, *, tm,
                 tile_budget, vmem_limit_bytes):
    """One Linear(+skip)+activation layer on padded activations."""
    w_main, w_res, b = lp["w_main"], lp["w_res"], lp["b"]
    compute_dtype = w_main.dtype
    M_pad = x_p.shape[0]
    K1_pad, N_pad = w_main.shape
    has_res = xres_p is not None
    K2_pad = w_res.shape[0] if has_res else 0
    out_dtype = x_p.dtype
    xsz = x_p.dtype.itemsize
    wsz = w_main.dtype.itemsize
    osz = jnp.dtype(out_dtype).itemsize

    flops = 2 * M_pad * (K1_pad + K2_pad) * N_pad
    transcend = M_pad * N_pad if activation in ("tanh", "sigmoid") else 0

    def ws_single(tn_):
        ws = 2 * (tm * K1_pad * xsz + K1_pad * tn_ * wsz)
        if has_res:
            ws += 2 * (tm * K2_pad * xsz + K2_pad * tn_ * wsz)
        ws += 2 * tn_ * 4
        ws += 2 * tm * tn_ * osz * (2 if want_pre else 1)
        return ws

    # Prefer the largest lane-dense tn that divides N_pad with a full-K step.
    tn = None
    for cand in (512, 256, 128):
        if N_pad % cand == 0 and ws_single(cand) <= tile_budget:
            tn = cand
            break
    single_k = tn is not None

    if not single_k and has_res:
        # TODO(synk): fuse very-wide skip concats into a K-segmented grid
        # instead of materializing the concat (only hit when the full-K
        # working set exceeds the VMEM budget).
        x_p = jnp.concatenate([x_p, xres_p], axis=-1)
        w_main = jnp.concatenate([w_main, w_res], axis=0)
        K1_pad = w_main.shape[0]
        has_res = False

    nm = M_pad // tm

    if single_k:
        grid = (nm, N_pad // tn)
        in_arrays = [x_p]
        in_specs = [pl.BlockSpec((tm, K1_pad), lambda i, j: (i, 0))]
        if has_res:
            in_arrays.append(xres_p)
            in_specs.append(pl.BlockSpec((tm, K2_pad), lambda i, j: (i, 0)))
        in_arrays.append(w_main)
        in_specs.append(pl.BlockSpec((K1_pad, tn), lambda i, j: (0, j)))
        if has_res:
            in_arrays.append(w_res)
            in_specs.append(pl.BlockSpec((K2_pad, tn), lambda i, j: (0, j)))
        in_arrays.append(b)
        in_specs.append(pl.BlockSpec((1, tn), lambda i, j: (0, j)))

        out_shape = jax.ShapeDtypeStruct((M_pad, N_pad), out_dtype)
        out_spec = pl.BlockSpec((tm, tn), lambda i, j: (i, j))
        if want_pre:
            out_shape = (out_shape, jax.ShapeDtypeStruct((M_pad, N_pad), out_dtype))
            out_spec = (out_spec, pl.BlockSpec((tm, tn), lambda i, j: (i, j)))

        bytes_accessed = (sum(a.size * a.dtype.itemsize for a in in_arrays)
                          + (2 if want_pre else 1) * M_pad * N_pad * osz)

        kernel = functools.partial(_linear_single_k_kernel, has_res=has_res,
                                   dual_out=want_pre, activation=activation,
                                   compute_dtype=compute_dtype)
        result = pl.pallas_call(
            kernel,
            out_shape=out_shape,
            grid_spec=pltpu.PrefetchScalarGridSpec(
                num_scalar_prefetch=0, grid=grid,
                in_specs=in_specs, out_specs=out_spec),
            compiler_params=pltpu.CompilerParams(
                dimension_semantics=("parallel", "parallel"),
                vmem_limit_bytes=vmem_limit_bytes),
            cost_estimate=pl.CostEstimate(flops=flops, transcendentals=transcend,
                                          bytes_accessed=bytes_accessed),
        )(*in_arrays)
        return (result[0], result[1]) if want_pre else (result, None)

    # Multi-K path (very large reduction dims).
    tn = _largest_divisor_tile(N_pad)
    tk = _largest_divisor_tile(K1_pad)

    def ws_multi(tn_, tk_):
        return (2 * (tm * tk_ * xsz + tk_ * tn_ * wsz + tn_ * 4)
                + 2 * tm * tn_ * osz * (2 if want_pre else 1)
                + tm * tn_ * 4)

    if ws_multi(tn, tk) > tile_budget:
        tn, tk = 128, 128

    grid = (nm, N_pad // tn, K1_pad // tk)
    in_specs = [
        pl.BlockSpec((tm, tk), lambda i, j, k: (i, k)),
        pl.BlockSpec((tk, tn), lambda i, j, k: (k, j)),
        pl.BlockSpec((1, tn), lambda i, j, k: (0, j)),
    ]
    out_shape = jax.ShapeDtypeStruct((M_pad, N_pad), out_dtype)
    out_spec = pl.BlockSpec((tm, tn), lambda i, j, k: (i, j))
    if want_pre:
        out_shape = (out_shape, jax.ShapeDtypeStruct((M_pad, N_pad), out_dtype))
        out_spec = (out_spec, pl.BlockSpec((tm, tn), lambda i, j, k: (i, j)))

    bytes_accessed = (x_p.size * xsz + w_main.size * wsz + b.size * 4
                      + (2 if want_pre else 1) * M_pad * N_pad * osz)

    kernel = functools.partial(_linear_multi_k_kernel, dual_out=want_pre,
                               activation=activation,
                               compute_dtype=compute_dtype)
    result = pl.pallas_call(
        kernel,
        out_shape=out_shape,
        grid_spec=pltpu.PrefetchScalarGridSpec(
            num_scalar_prefetch=0, grid=grid,
            in_specs=in_specs, out_specs=out_spec,
            scratch_shapes=[pltpu.VMEM((tm, tn), jnp.float32)]),
        compiler_params=pltpu.CompilerParams(
            dimension_semantics=("parallel", "parallel", "arbitrary"),
            vmem_limit_bytes=vmem_limit_bytes),
        cost_estimate=pl.CostEstimate(flops=flops, transcendentals=transcend,
                                      bytes_accessed=bytes_accessed),
    )(x_p, w_main, b)
    return (result[0], result[1]) if want_pre else (result, None)


def fc_module_forward_tiled(plan, x, activation="relu", *, tm_max=512,
                            tile_budget=None, vmem_limit_bytes=None):
    cap = _vmem_capacity_bytes()
    if tile_budget is None:
        tile_budget = min(cap * 3 // 8, 24 * 1024 * 1024)
    if vmem_limit_bytes is None:
        vmem_limit_bytes = min(cap * 3 // 4, 64 * 1024 * 1024)

    B, d0 = x.shape
    tm = min(tm_max, _round_up(max(B, 1), 8))
    M_pad = _round_up(B, tm)
    x_p = _pad_to(x, (M_pad, _round_up(d0, 128)))
    xres_p = x_p

    n_layers = len(plan)
    for i, lp in enumerate(plan):
        act_i = activation if i < n_layers - 1 else None
        later_skip = any(p["has_skip"] for p in plan[i + 1:])
        if lp["has_skip"]:
            want_pre = later_skip and act_i is not None
            y, y_pre = _tiled_layer(x_p, xres_p, lp, act_i, want_pre,
                                    tm=tm, tile_budget=tile_budget,
                                    vmem_limit_bytes=vmem_limit_bytes)
            if later_skip:
                xres_p = y_pre if want_pre else y
        else:
            y, _ = _tiled_layer(x_p, None, lp, act_i, False,
                                tm=tm, tile_budget=tile_budget,
                                vmem_limit_bytes=vmem_limit_bytes)
        x_p = y
    return x_p[:B, :plan[-1]["out_dim"]]


# ---------------------------------------------------------------------------
# Dispatcher
# ---------------------------------------------------------------------------
def _fused_footprint_bytes(plan, batch, tm_b=128):
    tm_b = min(tm_b, _round_up(max(batch, 1), 8))
    total = 0
    max_w = 128
    for lp in plan:
        total += 2 * lp["w_main"].size * lp["w_main"].dtype.itemsize
        if lp["w_res"] is not None:
            total += 2 * lp["w_res"].size * lp["w_res"].dtype.itemsize
            max_w = max(max_w, lp["w_res"].shape[0])
        total += 2 * lp["b"].size * lp["b"].dtype.itemsize
        max_w = max(max_w, lp["w_main"].shape[0], lp["w_main"].shape[1])
    total += 2 * 2 * tm_b * max_w * 4   # double-buffered x / out tiles (f32)
    total += 4 * tm_b * max_w * 4       # x, x_res, acc, temp slabs (f32)
    return total


def fc_module_forward(plan, x, activation="relu"):
    cap = _vmem_capacity_bytes()
    fused_budget = min(cap * 3 // 8, 48 * 1024 * 1024)   # ~24 MiB on v7x, 48 MiB v5e/v6e
    vmem_limit = min(cap * 3 // 4, 64 * 1024 * 1024)
    if _fused_footprint_bytes(plan, x.shape[0]) <= fused_budget:
        return fc_module_forward_fused(plan, x, activation,
                                       vmem_limit_bytes=vmem_limit)
    return fc_module_forward_tiled(plan, x, activation,
                                   tile_budget=min(cap * 3 // 8, 24 * 1024 * 1024),
                                   vmem_limit_bytes=vmem_limit)


# ---------------------------------------------------------------------------
# Parameter init (PyTorch-style uniform +-1/sqrt(fan_in)) and pure-JAX refs
# ---------------------------------------------------------------------------
def fc_module_layer_in_sizes(sizes, skip_layers):
    in_sizes = []
    prev_skip_size = sizes[0]
    for i, s_i in enumerate(sizes[:-1]):
        in_size_i = s_i
        if skip_layers is not None:
            if (i + 1) % (skip_layers + 1) == 0:
                in_size_i += prev_skip_size
                prev_skip_size = sizes[i + 1]
        in_sizes.append(in_size_i)
    return in_sizes


def init_fc_module_params(key, sizes, skip_layers):
    in_sizes = fc_module_layer_in_sizes(sizes, skip_layers)
    out_sizes = list(sizes[1:])
    params = []
    for in_s, out_s in zip(in_sizes, out_sizes):
        key, kw, kb = jax.random.split(key, 3)
        bound = 1.0 / jnp.sqrt(jnp.float32(in_s))
        w_t = jax.random.uniform(kw, (in_s, out_s), jnp.float32, -bound, bound)
        b = jax.random.uniform(kb, (1, out_s), jnp.float32, -bound, bound)
        params.append((w_t, b))
    return params


def fc_module_forward_ref(params, x, skip_layers, activation="relu",
                          compute_dtype=jnp.float32):
    """Pure-JAX reference mirroring the PyTorch forward (and the kernels'
    cast-to-compute_dtype matmul + f32 accumulate when compute_dtype!=f32)."""
    prec = jax.lax.Precision.HIGHEST if compute_dtype == jnp.float32 else None
    x = x.astype(jnp.float32)
    x_res = x
    n_layers = len(params)
    for i, (w_t, b) in enumerate(params):
        if skip_layers is not None and (i + 1) % (skip_layers + 1) == 0:
            x = jnp.concatenate([x, x_res], axis=-1)
        y = jnp.dot(x.astype(compute_dtype), w_t.astype(compute_dtype),
                    preferred_element_type=jnp.float32, precision=prec)
        x = y + b.astype(jnp.float32)
        if skip_layers is not None and (i + 1) % (skip_layers + 1) == 0:
            x_res = x  # pre-activation, as in the PyTorch module
        if i < n_layers - 1:
            x = _apply_activation(x, activation)
    return x


# ---------------------------------------------------------------------------
if __name__ == "__main__":
    key = jax.random.PRNGKey(0)

    # --- Test 1: fused path, f32 compute (exact structural check), relu + skips
    sizes = [32, 64, 64, 16]
    skip_layers = 2
    batch = 2
    k1, k2, key = jax.random.split(key, 3)
    params = init_fc_module_params(k1, sizes, skip_layers)
    x = jax.random.normal(k2, (batch, sizes[0]), jnp.float32)

    plan_f32 = prepare_fc_params(params, skip_layers, compute_dtype=jnp.float32)
    out = jax.block_until_ready(fc_module_forward(plan_f32, x, activation="relu"))
    ref = fc_module_forward_ref(params, x, skip_layers, "relu")
    assert out.shape == (batch, sizes[-1])
    assert jnp.allclose(out, ref, atol=1e-4, rtol=1e-4), "fused f32 relu mismatch"

    # --- Test 2: fused path, bf16 compute (default), tanh, no skips ---
    sizes2 = [24, 48, 8]
    k3, k4, key = jax.random.split(key, 3)
    params2 = init_fc_module_params(k3, sizes2, None)
    x2 = jax.random.normal(k4, (3, sizes2[0]), jnp.float32)
    plan2 = prepare_fc_params(params2, None)  # bf16 by default
    out2 = jax.block_until_ready(
        fc_module_forward_fused(plan2, x2, activation="tanh"))
    ref2 = fc_module_forward_ref(params2, x2, None, "tanh",
                                 compute_dtype=jnp.bfloat16)
    assert jnp.allclose(out2, ref2, atol=2e-2, rtol=2e-2), "fused bf16 tanh mismatch"

    # --- Test 3: tiled path (forced) at non-aligned shapes, leaky_relu + skips
    sizes3 = [200, 384, 512, 120]
    skip3 = 2
    batch3 = 130
    k5, k6, key = jax.random.split(key, 3)
    params3 = init_fc_module_params(k5, sizes3, skip3)
    x3 = jax.random.normal(k6, (batch3, sizes3[0]), jnp.float32)

    plan3_f32 = prepare_fc_params(params3, skip3, compute_dtype=jnp.float32)
    out3 = jax.block_until_ready(
        fc_module_forward_tiled(plan3_f32, x3, activation="leaky_relu"))
    ref3 = fc_module_forward_ref(params3, x3, skip3, "leaky_relu")
    assert out3.shape == (batch3, sizes3[-1])
    assert jnp.allclose(out3, ref3, atol=1e-3, rtol=1e-3), "tiled f32 mismatch"

    plan3_bf16 = prepare_fc_params(params3, skip3)  # bf16 by default
    out3b = jax.block_until_ready(
        fc_module_forward_tiled(plan3_bf16, x3, activation="leaky_relu"))
    ref3b = fc_module_forward_ref(params3, x3, skip3, "leaky_relu",
                                  compute_dtype=jnp.bfloat16)
    assert jnp.allclose(out3b, ref3b, atol=2e-2, rtol=2e-2), "tiled bf16 mismatch"

    print("KERNEL_OK")
</pallas_src>

<mosaic_0001>
module attributes {stable_mosaic.version = 11 : i64} {
  func.func @_fused_mlp_kernel(%arg0: i32, %arg1: memref<8x128xf32, #tpu.memory_space<vmem>>, %arg2: memref<128x128xf32, #tpu.memory_space<vmem>>, %arg3: memref<1x128xf32, #tpu.memory_space<vmem>>, %arg4: memref<128x128xf32, #tpu.memory_space<vmem>>, %arg5: memref<1x128xf32, #tpu.memory_space<vmem>>, %arg6: memref<128x128xf32, #tpu.memory_space<vmem>>, %arg7: memref<128x128xf32, #tpu.memory_space<vmem>>, %arg8: memref<1x128xf32, #tpu.memory_space<vmem>>, %arg9: memref<8x128xf32, #tpu.memory_space<vmem>>) attributes {dimension_semantics = [#tpu.dimension_semantics<parallel>], iteration_bounds = array<i64: 1>, scalar_prefetch = 0 : i64, scratch_operands = 0 : i64, tpu.core_type = #tpu.core_type<tc>, window_params = [{transform_indices = @transform_0, window_bounds = array<i64: 8, 128>}, {pipeline_mode = #tpu.pipeline_mode<synchronous>, transform_indices = @transform_1, window_bounds = array<i64: 128, 128>}, {pipeline_mode = #tpu.pipeline_mode<synchronous>, transform_indices = @transform_2, window_bounds = array<i64: 1, 128>}, {pipeline_mode = #tpu.pipeline_mode<synchronous>, transform_indices = @transform_3, window_bounds = array<i64: 128, 128>}, {pipeline_mode = #tpu.pipeline_mode<synchronous>, transform_indices = @transform_4, window_bounds = array<i64: 1, 128>}, {pipeline_mode = #tpu.pipeline_mode<synchronous>, transform_indices = @transform_5, window_bounds = array<i64: 128, 128>}, {pipeline_mode = #tpu.pipeline_mode<synchronous>, transform_indices = @transform_6, window_bounds = array<i64: 128, 128>}, {pipeline_mode = #tpu.pipeline_mode<synchronous>, transform_indices = @transform_7, window_bounds = array<i64: 1, 128>}, {transform_indices = @transform_8, window_bounds = array<i64: 8, 128>}]} {
    %c0 = arith.constant 0 : index
    %c0_0 = arith.constant 0 : index
    %0 = vector.load %arg1[%c0, %c0_0] : memref<8x128xf32, #tpu.memory_space<vmem>>, vector<8x128xf32>
    %c0_1 = arith.constant 0 : index
    %c0_2 = arith.constant 0 : index
    %1 = vector.load %arg2[%c0_1, %c0_2] : memref<128x128xf32, #tpu.memory_space<vmem>>, vector<128x128xf32>
    %cst = arith.constant dense<0.000000e+00> : vector<8x128xf32>
    %2 = tpu.matmul %0, %1, %cst {dimension_numbers = #tpu.dot_dimension_numbers<[1], [0], [0], [1], [0, 0, 1, 1], [], []>} : vector<8x128xf32>, vector<128x128xf32>, vector<8x128xf32> -> vector<8x128xf32>
    %c0_3 = arith.constant 0 : index
    %c0_4 = arith.constant 0 : index
    %3 = vector.load %arg3[%c0_3, %c0_4] : memref<1x128xf32, #tpu.memory_space<vmem>>, vector<1x128xf32>
    %4 = vector.broadcast %3 : vector<1x128xf32> to vector<8x128xf32>
    %5 = arith.addf %2, %4 : vector<8x128xf32>
    %cst_5 = arith.constant 0.000000e+00 : f32
    %6 = vector.broadcast %cst_5 : f32 to vector<8x128xf32>
    %7 = arith.maximumf %5, %6 : vector<8x128xf32>
    %c0_6 = arith.constant 0 : index
    %c0_7 = arith.constant 0 : index
    %8 = vector.load %arg4[%c0_6, %c0_7] : memref<128x128xf32, #tpu.memory_space<vmem>>, vector<128x128xf32>
    %cst_8 = arith.constant dense<0.000000e+00> : vector<8x128xf32>
    %9 = tpu.matmul %7, %8, %cst_8 {dimension_numbers = #tpu.dot_dimension_numbers<[1], [0], [0], [1], [0, 0, 1, 1], [], []>} : vector<8x128xf32>, vector<128x128xf32>, vector<8x128xf32> -> vector<8x128xf32>
    %c0_9 = arith.constant 0 : index
    %c0_10 = arith.constant 0 : index
    %10 = vector.load %arg5[%c0_9, %c0_10] : memref<1x128xf32, #tpu.memory_space<vmem>>, vector<1x128xf32>
    %11 = vector.broadcast %10 : vector<1x128xf32> to vector<8x128xf32>
    %12 = arith.addf %9, %11 : vector<8x128xf32>
    %cst_11 = arith.constant 0.000000e+00 : f32
    %13 = vector.broadcast %cst_11 : f32 to vector<8x128xf32>
    %14 = arith.maximumf %12, %13 : vector<8x128xf32>
    %c0_12 = arith.constant 0 : index
    %c0_13 = arith.constant 0 : index
    %15 = vector.load %arg6[%c0_12, %c0_13] : memref<128x128xf32, #tpu.memory_space<vmem>>, vector<128x128xf32>
    %cst_14 = arith.constant dense<0.000000e+00> : vector<8x128xf32>
    %16 = tpu.matmul %14, %15, %cst_14 {dimension_numbers = #tpu.dot_dimension_numbers<[1], [0], [0], [1], [0, 0, 1, 1], [], []>} : vector<8x128xf32>, vector<128x128xf32>, vector<8x128xf32> -> vector<8x128xf32>
    %c0_15 = arith.constant 0 : index
    %c0_16 = arith.constant 0 : index
    %17 = vector.load %arg7[%c0_15, %c0_16] : memref<128x128xf32, #tpu.memory_space<vmem>>, vector<128x128xf32>
    %cst_17 = arith.constant dense<0.000000e+00> : vector<8x128xf32>
    %18 = tpu.matmul %0, %17, %cst_17 {dimension_numbers = #tpu.dot_dimension_numbers<[1], [0], [0], [1], [0, 0, 1, 1], [], []>} : vector<8x128xf32>, vector<128x128xf32>, vector<8x128xf32> -> vector<8x128xf32>
    %19 = arith.addf %16, %18 : vector<8x128xf32>
    %c0_18 = arith.constant 0 : index
    %c0_19 = arith.constant 0 : index
    %20 = vector.load %arg8[%c0_18, %c0_19] : memref<1x128xf32, #tpu.memory_space<vmem>>, vector<1x128xf32>
    %21 = vector.broadcast %20 : vector<1x128xf32> to vector<8x128xf32>
    %22 = arith.addf %19, %21 : vector<8x128xf32>
    %c0_20 = arith.constant 0 : index
    %c0_21 = arith.constant 0 : index
    %23 = vector.load %arg9[%c0_20, %c0_21] : memref<8x128xf32, #tpu.memory_space<vmem>>, vector<8x128xf32>
    tpu.vector_store %arg9[%c0_20, %c0_21], %22 {strides = array<i32>} : memref<8x128xf32, #tpu.memory_space<vmem>>, vector<8x128xf32>,
    return
  }
  func.func @transform_0(%arg0: i32) -> (i32, i32) {
    %c0_i32 = arith.constant 0 : i32
    %c0_i32_0 = arith.constant 0 : i32
    return %arg0, %c0_i32 : i32, i32
  }
  func.func @transform_1(%arg0: i32) -> (i32, i32) {
    %c0_i32 = arith.constant 0 : i32
    %c0_i32_0 = arith.constant 0 : i32
    %c0_i32_1 = arith.constant 0 : i32
    return %c0_i32, %c0_i32_0 : i32, i32
  }
  func.func @transform_2(%arg0: i32) -> (i32, i32) {
    %c0_i32 = arith.constant 0 : i32
    %c0_i32_0 = arith.constant 0 : i32
    %c0_i32_1 = arith.constant 0 : i32
    return %c0_i32, %c0_i32_0 : i32, i32
  }
  func.func @transform_3(%arg0: i32) -> (i32, i32) {
    %c0_i32 = arith.constant 0 : i32
    %c0_i32_0 = arith.constant 0 : i32
    %c0_i32_1 = arith.constant 0 : i32
    return %c0_i32, %c0_i32_0 : i32, i32
  }
  func.func @transform_4(%arg0: i32) -> (i32, i32) {
    %c0_i32 = arith.constant 0 : i32
    %c0_i32_0 = arith.constant 0 : i32
    %c0_i32_1 = arith.constant 0 : i32
    return %c0_i32, %c0_i32_0 : i32, i32
  }
  func.func @transform_5(%arg0: i32) -> (i32, i32) {
    %c0_i32 = arith.constant 0 : i32
    %c0_i32_0 = arith.constant 0 : i32
    %c0_i32_1 = arith.constant 0 : i32
    return %c0_i32, %c0_i32_0 : i32, i32
  }
  func.func @transform_6(%arg0: i32) -> (i32, i32) {
    %c0_i32 = arith.constant 0 : i32
    %c0_i32_0 = arith.constant 0 : i32
    %c0_i32_1 = arith.constant 0 : i32
    return %c0_i32, %c0_i32_0 : i32, i32
  }
  func.func @transform_7(%arg0: i32) -> (i32, i32) {
    %c0_i32 = arith.constant 0 : i32
    %c0_i32_0 = arith.constant 0 : i32
    %c0_i32_1 = arith.constant 0 : i32
    return %c0_i32, %c0_i32_0 : i32, i32
  }
  func.func @transform_8(%arg0: i32) -> (i32, i32) {
    %c0_i32 = arith.constant 0 : i32
    %c0_i32_0 = arith.constant 0 : i32
    return %arg0, %c0_i32 : i32, i32
  }
}

</mosaic_0001>

<llo_original>
// kernel: tpu_custom_call.1
$region0: #{tpu_custom_call.1}
  #allocation0 [shape = 'u32[]', space=smem, size = 0x4, offset = 0x4, fixed_abs, tag = 'smem constant byte address 0x4 - core index']
  #allocation1 [shape = 'u32[144,128]{1,0:T(1,128)}', space=vmem, size = 0x12000, scoped, tag = 'internal scratch']
  %s0 = inlined_call_operand.hbm [shape: f32[8,128], index: 0, kind: input, shape index: {}]
  %s1 = inlined_call_operand.hbm [shape: f32[128,128], index: 1, kind: input, shape index: {}]
  %s2 = inlined_call_operand.vmem [shape: f32[1,128], index: 2, kind: input, shape index: {}]
  %s3 = inlined_call_operand.hbm [shape: f32[128,128], index: 3, kind: input, shape index: {}]
  %s4 = inlined_call_operand.vmem [shape: f32[1,128], index: 4, kind: input, shape index: {}]
  %s5 = inlined_call_operand.hbm [shape: f32[128,128], index: 5, kind: input, shape index: {}]
  %s6 = inlined_call_operand.hbm [shape: f32[128,128], index: 6, kind: input, shape index: {}]
  %s7 = inlined_call_operand.vmem [shape: f32[1,128], index: 7, kind: input, shape index: {}]
  %s8 = inlined_call_operand.hbm [shape: f32[8,128], index: 8, kind: output, shape index: {}]
  %s9 = sld [smem:[#allocation0]]
  $region62: #{tpu_custom_call.1} parent=0
    _
  %s11 = ssub.s32 1, %s9
  %s12 = scalar_select 0, %s11, %s9
  $region1: #{tpu_custom_call.1} parent=0
    #allocation2 [shape = 'u8[4096]{0}', space=vmem, size = 0x1000, scoped, tag = 'input window, operand 0, single buffered']
    #allocation3 [shape = 's32[1]{0}', space=sflag, size = 0x4, scoped, tag = 'scoped memory for tpu_custom_call.1']
    #allocation4 [shape = 's32[1]{0}', space=sflag, size = 0x4, scoped, tag = 'scoped memory for tpu_custom_call.1']
    #allocation5 [shape = 'u8[65536]{0}', space=vmem, size = 0x10000, scoped, tag = 'input window, operand 1, single buffered']
    #allocation6 [shape = 's32[1]{0}', space=sflag, size = 0x4, scoped, tag = 'scoped memory for tpu_custom_call.1']
    #allocation7 [shape = 'u8[65536]{0}', space=vmem, size = 0x10000, scoped, tag = 'input window, operand 3, single buffered']
    #allocation8 [shape = 'u8[65536]{0}', space=vmem, size = 0x10000, scoped, tag = 'input window, operand 5, single buffered']
    #allocation9 [shape = 's32[1]{0}', space=sflag, size = 0x4, scoped, tag = 'scoped memory for tpu_custom_call.1']
    #allocation10 [shape = 'u8[65536]{0}', space=vmem, size = 0x10000, scoped, tag = 'input window, operand 6, single buffered']
    #allocation11 [shape = 'u8[4096]{0}', space=vmem, size = 0x1000, scoped, tag = 'output window, operand 0, single buffered']
    %13 = vsyncpa [#allocation3], 0
    %14 = vsyncpa [#allocation6], 0
    %15 = vsyncpa [#allocation9], 0
    %16 = vsyncpa [#allocation4], 0
    // Predicated region
    $region2: #{tpu_custom_call.1} parent=1 // pred_check
      _
    $region3: #{tpu_custom_call.1} parent=1 // pred_check_branch
      %18 = sbr.rel (0) target = $region5
    $region4: #{tpu_custom_call.1} parent=1 // pred_region
      %s20 = ssub.s32 128, 128
      %21 = vsyncadd [#allocation3], %s20
      %s23 = sshll.u32 [#allocation2], 4
      %s24 = int_to_ptr.vmem [resolvable:$true] %s23
      %26 = dma.hbm_to_vmem [thread:$0]  %s0, 128, %s24, [#allocation3]
    $region5: #{tpu_custom_call.1} parent=1 // pred_fallthru
      _
    // Predicated region
    $region6: #{tpu_custom_call.1} parent=1 // pred_check
      _
    $region7: #{tpu_custom_call.1} parent=1 // pred_check_branch
      %28 = sbr.rel (0) target = $region9
    $region8: #{tpu_custom_call.1} parent=1 // pred_region
      %s30 = ssub.s32 2048, 2048
      %31 = vsyncadd [#allocation6], %s30
      %s32 = sshll.u32 [#allocation5], 4
      %s33 = int_to_ptr.vmem [resolvable:$true] %s32
      %38 = dma.hbm_to_vmem [thread:$0]  %s1, 2048, %s33, [#allocation6], 128, 128, 8
    $region9: #{tpu_custom_call.1} parent=1 // pred_fallthru
      _
    // Predicated region
    $region10: #{tpu_custom_call.1} parent=1 // pred_check
      _
    $region11: #{tpu_custom_call.1} parent=1 // pred_check_branch
      %40 = sbr.rel (0) target = $region13
    $region12: #{tpu_custom_call.1} parent=1 // pred_region
      _
    $region13: #{tpu_custom_call.1} parent=1 // pred_fallthru
      _
    // Predicated region
    $region14: #{tpu_custom_call.1} parent=1 // pred_check
      _
    $region15: #{tpu_custom_call.1} parent=1 // pred_check_branch
      %42 = sbr.rel (0) target = $region17
    $region16: #{tpu_custom_call.1} parent=1 // pred_region
      %s44 = ssub.s32 2048, 2048
      %45 = vsyncadd [#allocation6], %s44
      %s46 = sshll.u32 [#allocation7], 4
      %s47 = int_to_ptr.vmem [resolvable:$true] %s46
      %52 = dma.hbm_to_vmem [thread:$0]  %s3, 2048, %s47, [#allocation6], 128, 128, 8
    $region17: #{tpu_custom_call.1} parent=1 // pred_fallthru
      _
    // Predicated region
    $region18: #{tpu_custom_call.1} parent=1 // pred_check
      _
    $region19: #{tpu_custom_call.1} parent=1 // pred_check_branch
      %54 = sbr.rel (0) target = $region21
    $region20: #{tpu_custom_call.1} parent=1 // pred_region
      _
    $region21: #{tpu_custom_call.1} parent=1 // pred_fallthru
      _
    // Predicated region
    $region22: #{tpu_custom_call.1} parent=1 // pred_check
      _
    $region23: #{tpu_custom_call.1} parent=1 // pred_check_branch
      %56 = sbr.rel (0) target = $region25
    $region24: #{tpu_custom_call.1} parent=1 // pred_region
      %s58 = ssub.s32 2048, 2048
      %59 = vsyncadd [#allocation9], %s58
      %s60 = sshll.u32 [#allocation8], 4
      %s61 = int_to_ptr.vmem [resolvable:$true] %s60
      %66 = dma.hbm_to_vmem [thread:$0]  %s5, 2048, %s61, [#allocation9], 128, 128, 8
    $region25: #{tpu_custom_call.1} parent=1 // pred_fallthru
      _
    // Predicated region
    $region26: #{tpu_custom_call.1} parent=1 // pred_check
      _
    $region27: #{tpu_custom_call.1} parent=1 // pred_check_branch
      %68 = sbr.rel (0) target = $region29
    $region28: #{tpu_custom_call.1} parent=1 // pred_region
      %s70 = ssub.s32 2048, 2048
      %71 = vsyncadd [#allocation9], %s70
      %s72 = sshll.u32 [#allocation10], 4
      %s73 = int_to_ptr.vmem [resolvable:$true] %s72
      %78 = dma.hbm_to_vmem [thread:$0]  %s6, 2048, %s73, [#allocation9], 128, 128, 8
    $region29: #{tpu_custom_call.1} parent=1 // pred_fallthru
      _
    // Predicated region
    $region30: #{tpu_custom_call.1} parent=1 // pred_check
      _
    $region31: #{tpu_custom_call.1} parent=1 // pred_check_branch
      %80 = sbr.rel (0) target = $region33
    $region32: #{tpu_custom_call.1} parent=1 // pred_region
      _
    $region33: #{tpu_custom_call.1} parent=1 // pred_fallthru
      _
    // Predicated region
    $region34: #{tpu_custom_call.1} parent=1 // pred_check
      _
    $region35: #{tpu_custom_call.1} parent=1 // pred_check_branch
      %82 = sbr.rel (0) target = $region37
    $region36: #{tpu_custom_call.1} parent=1 // pred_region
      %83 = dma.done [#allocation3], 128
    $region37: #{tpu_custom_call.1} parent=1 // pred_fallthru
      _
    // Predicated region
    $region38: #{tpu_custom_call.1} parent=1 // pred_check
      _
    $region39: #{tpu_custom_call.1} parent=1 // pred_check_branch
      %85 = sbr.rel (0) target = $region41
    $region40: #{tpu_custom_call.1} parent=1 // pred_region
      %86 = dma.done [#allocation6], 2048
    $region41: #{tpu_custom_call.1} parent=1 // pred_fallthru
      _
    // Predicated region
    $region42: #{tpu_custom_call.1} parent=1 // pred_check
      _
    $region43: #{tpu_custom_call.1} parent=1 // pred_check_branch
      %88 = sbr.rel (0) target = $region45
    $region44: #{tpu_custom_call.1} parent=1 // pred_region
      %89 = dma.done [#allocation6], 2048
    $region45: #{tpu_custom_call.1} parent=1 // pred_fallthru
      _
    // Predicated region
    $region46: #{tpu_custom_call.1} parent=1 // pred_check
      _
    $region47: #{tpu_custom_call.1} parent=1 // pred_check_branch
      %91 = sbr.rel (0) target = $region49
    $region48: #{tpu_custom_call.1} parent=1 // pred_region
      %92 = dma.done [#allocation9], 2048
    $region49: #{tpu_custom_call.1} parent=1 // pred_fallthru
      _
    // Predicated region
    $region50: #{tpu_custom_call.1} parent=1 // pred_check
      _
    $region51: #{tpu_custom_call.1} parent=1 // pred_check_branch
      %94 = sbr.rel (0) target = $region53
    $region52: #{tpu_custom_call.1} parent=1 // pred_region
      %95 = dma.done [#allocation9], 2048
    $region53: #{tpu_custom_call.1} parent=1 // pred_fallthru
      _
    %v96 = vld [vmem:[#allocation2] sm:$0xff]
    %v97 = vld [vmem:[#allocation5] sm:$0xff]
    %v98 = vld [vmem:[#allocation5 + $0x8] sm:$0xff]
    %v99 = vld [vmem:[#allocation5 + $0x10] sm:$0xff]
    %v100 = vld [vmem:[#allocation5 + $0x18] sm:$0xff]
    %v101 = vld [vmem:[#allocation5 + $0x20] sm:$0xff]
    %v102 = vld [vmem:[#allocation5 + $0x28] sm:$0xff]
    %v103 = vld [vmem:[#allocation5 + $0x30] sm:$0xff]
    %v104 = vld [vmem:[#allocation5 + $0x38] sm:$0xff]
    %v105 = vld [vmem:[#allocation5 + $0x40] sm:$0xff]
    %v106 = vld [vmem:[#allocation5 + $0x48] sm:$0xff]
    %v107 = vld [vmem:[#allocation5 + $0x50] sm:$0xff]
    %v108 = vld [vmem:[#allocation5 + $0x58] sm:$0xff]
    %v109 = vld [vmem:[#allocation5 + $0x60] sm:$0xff]
    %v110 = vld [vmem:[#allocation5 + $0x68] sm:$0xff]
    %v111 = vld [vmem:[#allocation5 + $0x70] sm:$0xff]
    %v112 = vld [vmem:[#allocation5 + $0x78] sm:$0xff]
    %v113 = vld [vmem:[%s2] sm:$0x1]
    %v115 = vlaneseq
    %v116 = vshrl.u32 %v115, 7
    %v117 = vsub.s32 0, %v116
    %v118 = vrot.slane %v113, %v117
    %120 = vmatprep.subr.mxu0 0.0
    %121 = vmatpush1.msra.mxu0 %v97
    %122 = vmatprep.subr.mxu0 0.0
    %123 = vmatpush1.msra.mxu0 %v98
    %124 = vmatprep.subr.mxu0 0.0
    %125 = vmatpush1.msra.mxu0 %v99
    %126 = vmatprep.subr.mxu0 0.0
    %127 = vmatpush1.msra.mxu0 %v100
    %128 = vmatprep.subr.mxu0 0.0
    %129 = vmatpush1.msra.mxu0 %v101
    %130 = vmatprep.subr.mxu0 0.0
    %131 = vmatpush1.msra.mxu0 %v102
    %132 = vmatprep.subr.mxu0 0.0
    %133 = vmatpush1.msra.mxu0 %v103
    %134 = vmatprep.subr.mxu0 0.0
    %135 = vmatpush1.msra.mxu0 %v104
    %136 = vmatprep.subr.mxu0 0.0
    %137 = vmatpush1.msra.mxu0 %v105
    %138 = vmatprep.subr.mxu0 0.0
    %139 = vmatpush1.msra.mxu0 %v106
    %140 = vmatprep.subr.mxu0 0.0
    %141 = vmatpush1.msra.mxu0 %v107
    %142 = vmatprep.subr.mxu0 0.0
    %143 = vmatpush1.msra.mxu0 %v108
    %144 = vmatprep.subr.mxu0 0.0
    %145 = vmatpush1.msra.mxu0 %v109
    %146 = vmatprep.subr.mxu0 0.0
    %147 = vmatpush1.msra.mxu0 %v110
    %148 = vmatprep.subr.mxu0 0.0
    %149 = vmatpush1.msra.mxu0 %v111
    %150 = vmatprep.subr.mxu0 0.0
    %151 = vmatpush1.msra.mxu0 %v112
    %152 = vmatprep.subr.mxu0 0.0
    %153 = vmatpush1.msra.mxu0 0.0
    %154 = vmatprep.subr.mxu0 0.0
    %155 = vmatpush1.msra.mxu0 0.0
    %156 = vmatprep.subr.mxu0 0.0
    %157 = vmatpush1.msra.mxu0 0.0
    %158 = vmatprep.subr.mxu0 0.0
    %159 = vmatpush1.msra.mxu0 0.0
    %160 = vmatprep.subr.mxu0 0.0
    %161 = vmatpush1.msra.mxu0 0.0
    %162 = vmatprep.subr.mxu0 0.0
    %163 = vmatpush1.msra.mxu0 0.0
    %164 = vmatprep.subr.mxu0 0.0
    %165 = vmatpush1.msra.mxu0 0.0
    %166 = vmatprep.subr.mxu0 0.0
    %167 = vmatpush1.msra.mxu0 0.0
    %168 = vmatprep.subr.mxu0 0.0
    %169 = vmatpush1.msra.mxu0 0.0
    %170 = vmatprep.subr.mxu0 0.0
    %171 = vmatpush1.msra.mxu0 0.0
    %172 = vmatprep.subr.mxu0 0.0
    %173 = vmatpush1.msra.mxu0 0.0
    %174 = vmatprep.subr.mxu0 0.0
    %175 = vmatpush1.msra.mxu0 0.0
    %176 = vmatprep.subr.mxu0 0.0
    %177 = vmatpush1.msra.mxu0 0.0
    %178 = vmatprep.subr.mxu0 0.0
    %179 = vmatpush1.msra.mxu0 0.0
    %180 = vmatprep.subr.mxu0 0.0
    %181 = vmatpush1.msra.mxu0 0.0
    %182 = vmatprep.subr.mxu0 0.0
    %183 = vmatpush1.msra.mxu0 0.0
    %184 = vmatprep.mubr.f32.mxu0 0.0
    %185 = vmatmul.mubr.f32.gmra.mrb[0].mxu0 %v96
    %v186 = vpop.f32.mrb[0].mxu0
    %v187 = vadd.f32 %v118, %v186
    %v188 = vpop.f32.mrb[0].mxu0
    %189 = vdwg.mxu0
    %v190 = vmax.f32 %v187, 0.0
    %v191 = vld [vmem:[#allocation7] sm:$0xff]
    %v192 = vld [vmem:[#allocation7 + $0x8] sm:$0xff]
    %v193 = vld [vmem:[#allocation7 + $0x10] sm:$0xff]
    %v194 = vld [vmem:[#allocation7 + $0x18] sm:$0xff]
    %v195 = vld [vmem:[#allocation7 + $0x20] sm:$0xff]
    %v196 = vld [vmem:[#allocation7 + $0x28] sm:$0xff]
    %v197 = vld [vmem:[#allocation7 + $0x30] sm:$0xff]
    %v198 = vld [vmem:[#allocation7 + $0x38] sm:$0xff]
    %v199 = vld [vmem:[#allocation7 + $0x40] sm:$0xff]
    %v200 = vld [vmem:[#allocation7 + $0x48] sm:$0xff]
    %v201 = vld [vmem:[#allocation7 + $0x50] sm:$0xff]
    %v202 = vld [vmem:[#allocation7 + $0x58] sm:$0xff]
    %v203 = vld [vmem:[#allocation7 + $0x60] sm:$0xff]
    %v204 = vld [vmem:[#allocation7 + $0x68] sm:$0xff]
    %v205 = vld [vmem:[#allocation7 + $0x70] sm:$0xff]
    %v206 = vld [vmem:[#allocation7 + $0x78] sm:$0xff]
    %v207 = vld [vmem:[%s4] sm:$0x1]
    %v209 = vlaneseq
    %v210 = vshrl.u32 %v209, 7
    %v211 = vsub.s32 0, %v210
    %v212 = vrot.slane %v207, %v211
    %214 = vmatprep.subr.mxu0 0.0
    %215 = vmatpush1.msra.mxu0 %v191
    %216 = vmatprep.subr.mxu0 0.0
    %217 = vmatpush1.msra.mxu0 %v192
    %218 = vmatprep.subr.mxu0 0.0
    %219 = vmatpush1.msra.mxu0 %v193
    %220 = vmatprep.subr.mxu0 0.0
    %221 = vmatpush1.msra.mxu0 %v194
    %222 = vmatprep.subr.mxu0 0.0
    %223 = vmatpush1.msra.mxu0 %v195
    %224 = vmatprep.subr.mxu0 0.0
    %225 = vmatpush1.msra.mxu0 %v196
    %226 = vmatprep.subr.mxu0 0.0
    %227 = vmatpush1.msra.mxu0 %v197
    %228 = vmatprep.subr.mxu0 0.0
    %229 = vmatpush1.msra.mxu0 %v198
    %230 = vmatprep.subr.mxu0 0.0
    %231 = vmatpush1.msra.mxu0 %v199
    %232 = vmatprep.subr.mxu0 0.0
    %233 = vmatpush1.msra.mxu0 %v200
    %234 = vmatprep.subr.mxu0 0.0
    %235 = vmatpush1.msra.mxu0 %v201
    %236 = vmatprep.subr.mxu0 0.0
    %237 = vmatpush1.msra.mxu0 %v202
    %238 = vmatprep.subr.mxu0 0.0
    %239 = vmatpush1.msra.mxu0 %v203
    %240 = vmatprep.subr.mxu0 0.0
    %241 = vmatpush1.msra.mxu0 %v204
    %242 = vmatprep.subr.mxu0 0.0
    %243 = vmatpush1.msra.mxu0 %v205
    %244 = vmatprep.subr.mxu0 0.0
    %245 = vmatpush1.msra.mxu0 %v206
    %246 = vmatprep.subr.mxu0 0.0
    %247 = vmatpush1.msra.mxu0 0.0
    %248 = vmatprep.subr.mxu0 0.0
    %249 = vmatpush1.msra.mxu0 0.0
    %250 = vmatprep.subr.mxu0 0.0
    %251 = vmatpush1.msra.mxu0 0.0
    %252 = vmatprep.subr.mxu0 0.0
    %253 = vmatpush1.msra.mxu0 0.0
    %254 = vmatprep.subr.mxu0 0.0
    %255 = vmatpush1.msra.mxu0 0.0
    %256 = vmatprep.subr.mxu0 0.0
    %257 = vmatpush1.msra.mxu0 0.0
    %258 = vmatprep.subr.mxu0 0.0
    %259 = vmatpush1.msra.mxu0 0.0
    %260 = vmatprep.subr.mxu0 0.0
    %261 = vmatpush1.msra.mxu0 0.0
    %262 = vmatprep.subr.mxu0 0.0
    %263 = vmatpush1.msra.mxu0 0.0
    %264 = vmatprep.subr.mxu0 0.0
    %265 = vmatpush1.msra.mxu0 0.0
    %266 = vmatprep.subr.mxu0 0.0
    %267 = vmatpush1.msra.mxu0 0.0
    %268 = vmatprep.subr.mxu0 0.0
    %269 = vmatpush1.msra.mxu0 0.0
    %270 = vmatprep.subr.mxu0 0.0
    %271 = vmatpush1.msra.mxu0 0.0
    %272 = vmatprep.subr.mxu0 0.0
    %273 = vmatpush1.msra.mxu0 0.0
    %274 = vmatprep.subr.mxu0 0.0
    %275 = vmatpush1.msra.mxu0 0.0
    %276 = vmatprep.subr.mxu0 0.0
    %277 = vmatpush1.msra.mxu0 0.0
    %278 = vmatprep.mubr.f32.mxu0 0.0
    %279 = vmatmul.mubr.f32.gmra.mrb[0].mxu0 %v190
    %v280 = vpop.f32.mrb[0].mxu0
    %v281 = vadd.f32 %v212, %v280
    %v282 = vpop.f32.mrb[0].mxu0
    %283 = vdwg.mxu0
    %v284 = vmax.f32 %v281, 0.0
    %v285 = vld [vmem:[#allocation8] sm:$0xff]
    %v286 = vld [vmem:[#allocation8 + $0x8] sm:$0xff]
    %v287 = vld [vmem:[#allocation8 + $0x10] sm:$0xff]
    %v288 = vld [vmem:[#allocation8 + $0x18] sm:$0xff]
    %v289 = vld [vmem:[#allocation8 + $0x20] sm:$0xff]
    %v290 = vld [vmem:[#allocation8 + $0x28] sm:$0xff]
    %v291 = vld [vmem:[#allocation8 + $0x30] sm:$0xff]
    %v292 = vld [vmem:[#allocation8 + $0x38] sm:$0xff]
    %v293 = vld [vmem:[#allocation8 + $0x40] sm:$0xff]
    %v294 = vld [vmem:[#allocation8 + $0x48] sm:$0xff]
    %v295 = vld [vmem:[#allocation8 + $0x50] sm:$0xff]
    %v296 = vld [vmem:[#allocation8 + $0x58] sm:$0xff]
    %v297 = vld [vmem:[#allocation8 + $0x60] sm:$0xff]
    %v298 = vld [vmem:[#allocation8 + $0x68] sm:$0xff]
    %v299 = vld [vmem:[#allocation8 + $0x70] sm:$0xff]
    %v300 = vld [vmem:[#allocation8 + $0x78] sm:$0xff]
    %v301 = vld [vmem:[#allocation10] sm:$0xff]
    %v302 = vld [vmem:[#allocation10 + $0x8] sm:$0xff]
    %v303 = vld [vmem:[#allocation10 + $0x10] sm:$0xff]
    %v304 = vld [vmem:[#allocation10 + $0x18] sm:$0xff]
    %v305 = vld [vmem:[#allocation10 + $0x20] sm:$0xff]
    %v306 = vld [vmem:[#allocation10 + $0x28] sm:$0xff]
    %v307 = vld [vmem:[#allocation10 + $0x30] sm:$0xff]
    %v308 = vld [vmem:[#allocation10 + $0x38] sm:$0xff]
    %v309 = vld [vmem:[#allocation10 + $0x40] sm:$0xff]
    %v310 = vld [vmem:[#allocation10 + $0x48] sm:$0xff]
    %v311 = vld [vmem:[#allocation10 + $0x50] sm:$0xff]
    %v312 = vld [vmem:[#allocation10 + $0x58] sm:$0xff]
    %v313 = vld [vmem:[#allocation10 + $0x60] sm:$0xff]
    %v314 = vld [vmem:[#allocation10 + $0x68] sm:$0xff]
    %v315 = vld [vmem:[#allocation10 + $0x70] sm:$0xff]
    %v316 = vld [vmem:[#allocation10 + $0x78] sm:$0xff]
    %317 = vmatprep.subr.mxu0 0.0
    %318 = vmatpush1.msra.mxu0 %v301
    %319 = vmatprep.subr.mxu0 0.0
    %320 = vmatpush1.msra.mxu0 %v302
    %321 = vmatprep.subr.mxu0 0.0
    %322 = vmatpush1.msra.mxu0 %v303
    %323 = vmatprep.subr.mxu0 0.0
    %324 = vmatpush1.msra.mxu0 %v304
    %325 = vmatprep.subr.mxu0 0.0
    %326 = vmatpush1.msra.mxu0 %v305
    %327 = vmatprep.subr.mxu0 0.0
    %328 = vmatpush1.msra.mxu0 %v306
    %329 = vmatprep.subr.mxu0 0.0
    %330 = vmatpush1.msra.mxu0 %v307
    %331 = vmatprep.subr.mxu0 0.0
    %332 = vmatpush1.msra.mxu0 %v308
    %333 = vmatprep.subr.mxu0 0.0
    %334 = vmatpush1.msra.mxu0 %v309
    %335 = vmatprep.subr.mxu0 0.0
    %336 = vmatpush1.msra.mxu0 %v310
    %337 = vmatprep.subr.mxu0 0.0
    %338 = vmatpush1.msra.mxu0 %v311
    %339 = vmatprep.subr.mxu0 0.0
    %340 = vmatpush1.msra.mxu0 %v312
    %341 = vmatprep.subr.mxu0 0.0
    %342 = vmatpush1.msra.mxu0 %v313
    %343 = vmatprep.subr.mxu0 0.0
    %344 = vmatpush1.msra.mxu0 %v314
    %345 = vmatprep.subr.mxu0 0.0
    %346 = vmatpush1.msra.mxu0 %v315
    %347 = vmatprep.subr.mxu0 0.0
    %348 = vmatpush1.msra.mxu0 %v316
    %349 = vmatprep.subr.mxu0 0.0
    %350 = vmatpush1.msra.mxu0 0.0
    %351 = vmatprep.subr.mxu0 0.0
    %352 = vmatpush1.msra.mxu0 0.0
    %353 = vmatprep.subr.mxu0 0.0
    %354 = vmatpush1.msra.mxu0 0.0
    %355 = vmatprep.subr.mxu0 0.0
    %356 = vmatpush1.msra.mxu0 0.0
    %357 = vmatprep.subr.mxu0 0.0
    %358 = vmatpush1.msra.mxu0 0.0
    %359 = vmatprep.subr.mxu0 0.0
    %360 = vmatpush1.msra.mxu0 0.0
    %361 = vmatprep.subr.mxu0 0.0
    %362 = vmatpush1.msra.mxu0 0.0
    %363 = vmatprep.subr.mxu0 0.0
    %364 = vmatpush1.msra.mxu0 0.0
    %365 = vmatprep.subr.mxu0 0.0
    %366 = vmatpush1.msra.mxu0 0.0
    %367 = vmatprep.subr.mxu0 0.0
    %368 = vmatpush1.msra.mxu0 0.0
    %369 = vmatprep.subr.mxu0 0.0
    %370 = vmatpush1.msra.mxu0 0.0
    %371 = vmatprep.subr.mxu0 0.0
    %372 = vmatpush1.msra.mxu0 0.0
    %373 = vmatprep.subr.mxu0 0.0
    %374 = vmatpush1.msra.mxu0 0.0
    %375 = vmatprep.subr.mxu0 0.0
    %376 = vmatpush1.msra.mxu0 0.0
    %377 = vmatprep.subr.mxu0 0.0
    %378 = vmatpush1.msra.mxu0 0.0
    %379 = vmatprep.subr.mxu0 0.0
    %380 = vmatpush1.msra.mxu0 0.0
    %381 = vmatprep.mubr.f32.mxu0 0.0
    %382 = vmatmul.mubr.f32.gmra.mrb[0].mxu0 %v96
    %v383 = vpop.f32.mrb[0].mxu0
    %v384 = vadd.f32 0.0, %v383
    %v385 = vpop.f32.mrb[0].mxu0
    %386 = vdwg.mxu0
    %387 = vmatprep.subr.mxu0 0.0
    %388 = vmatpush1.msra.mxu0 %v285
    %389 = vmatprep.subr.mxu0 0.0
    %390 = vmatpush1.msra.mxu0 %v286
    %391 = vmatprep.subr.mxu0 0.0
    %392 = vmatpush1.msra.mxu0 %v287
    %393 = vmatprep.subr.mxu0 0.0
    %394 = vmatpush1.msra.mxu0 %v288
    %395 = vmatprep.subr.mxu0 0.0
    %396 = vmatpush1.msra.mxu0 %v289
    %397 = vmatprep.subr.mxu0 0.0
    %398 = vmatpush1.msra.mxu0 %v290
    %399 = vmatprep.subr.mxu0 0.0
    %400 = vmatpush1.msra.mxu0 %v291
    %401 = vmatprep.subr.mxu0 0.0
    %402 = vmatpush1.msra.mxu0 %v292
    %403 = vmatprep.subr.mxu0 0.0
    %404 = vmatpush1.msra.mxu0 %v293
    %405 = vmatprep.subr.mxu0 0.0
    %406 = vmatpush1.msra.mxu0 %v294
    %407 = vmatprep.subr.mxu0 0.0
    %408 = vmatpush1.msra.mxu0 %v295
    %409 = vmatprep.subr.mxu0 0.0
    %410 = vmatpush1.msra.mxu0 %v296
    %411 = vmatprep.subr.mxu0 0.0
    %412 = vmatpush1.msra.mxu0 %v297
    %413 = vmatprep.subr.mxu0 0.0
    %414 = vmatpush1.msra.mxu0 %v298
    %415 = vmatprep.subr.mxu0 0.0
    %416 = vmatpush1.msra.mxu0 %v299
    %417 = vmatprep.subr.mxu0 0.0
    %418 = vmatpush1.msra.mxu0 %v300
    %419 = vmatprep.subr.mxu0 0.0
    %420 = vmatpush1.msra.mxu0 0.0
    %421 = vmatprep.subr.mxu0 0.0
    %422 = vmatpush1.msra.mxu0 0.0
    %423 = vmatprep.subr.mxu0 0.0
    %424 = vmatpush1.msra.mxu0 0.0
    %425 = vmatprep.subr.mxu0 0.0
    %426 = vmatpush1.msra.mxu0 0.0
    %427 = vmatprep.subr.mxu0 0.0
    %428 = vmatpush1.msra.mxu0 0.0
    %429 = vmatprep.subr.mxu0 0.0
    %430 = vmatpush1.msra.mxu0 0.0
    %431 = vmatprep.subr.mxu0 0.0
    %432 = vmatpush1.msra.mxu0 0.0
    %433 = vmatprep.subr.mxu0 0.0
    %434 = vmatpush1.msra.mxu0 0.0
    %435 = vmatprep.subr.mxu0 0.0
    %436 = vmatpush1.msra.mxu0 0.0
    %437 = vmatprep.subr.mxu0 0.0
    %438 = vmatpush1.msra.mxu0 0.0
    %439 = vmatprep.subr.mxu0 0.0
    %440 = vmatpush1.msra.mxu0 0.0
    %441 = vmatprep.subr.mxu0 0.0
    %442 = vmatpush1.msra.mxu0 0.0
    %443 = vmatprep.subr.mxu0 0.0
    %444 = vmatpush1.msra.mxu0 0.0
    %445 = vmatprep.subr.mxu0 0.0
    %446 = vmatpush1.msra.mxu0 0.0
    %447 = vmatprep.subr.mxu0 0.0
    %448 = vmatpush1.msra.mxu0 0.0
    %449 = vmatprep.subr.mxu0 0.0
    %450 = vmatpush1.msra.mxu0 0.0
    %451 = vmatprep.mubr.f32.mxu0 0.0
    %452 = vmatmul.mubr.f32.gmra.mrb[0].mxu0 %v284
    %v453 = vpop.f32.mrb[0].mxu0
    %v454 = vadd.f32 %v384, %v453
    %v455 = vpop.f32.mrb[0].mxu0
    %456 = vdwg.mxu0
    %v457 = vld [vmem:[%s7] sm:$0x1]
    %v459 = vlaneseq
    %v460 = vshrl.u32 %v459, 7
    %v461 = vsub.s32 0, %v460
    %v462 = vrot.slane %v457, %v461
    %v464 = vadd.f32 %v454, %v462
    %465 = vst [vmem:[#allocation11] sm:$0xff] %v464
    // Predicated region
    $region54: #{tpu_custom_call.1} parent=1 // pred_check
      _
    $region55: #{tpu_custom_call.1} parent=1 // pred_check_branch
      %467 = sbr.rel (0) target = $region57
    $region56: #{tpu_custom_call.1} parent=1 // pred_region
      %s469 = ssub.s32 128, 128
      %470 = vsyncadd [#allocation4], %s469
      %s472 = sshll.u32 [#allocation11], 4
      %s473 = int_to_ptr.vmem [resolvable:$true] %s472
      %475 = dma.vmem_to_hbm [thread:$0]  %s473, 128, %s8, [#allocation4]
    $region57: #{tpu_custom_call.1} parent=1 // pred_fallthru
      _
    // Predicated region
    $region58: #{tpu_custom_call.1} parent=1 // pred_check
      _
    $region59: #{tpu_custom_call.1} parent=1 // pred_check_branch
      %477 = sbr.rel (0) target = $region61
    $region60: #{tpu_custom_call.1} parent=1 // pred_region
      %478 = dma.done [#allocation4], 128
    $region61: #{tpu_custom_call.1} parent=1 // pred_fallthru
      _
    %479 = vsyncpa [#allocation3], 1
    %480 = vsyncpa [#allocation6], 1
    %481 = vsyncpa [#allocation9], 1
    %482 = vsyncpa [#allocation4], 1

</llo_original>
